<compile_context>
chip_gen: v5e
topology: v5e:2x2
jax: 0.10.0
libtpu: 0.0.40
codegen_flags: <defaults>
</compile_context>

<pallas_src>
import functools

import jax
import jax.numpy as jnp
from jax.experimental import pallas as pl
from jax.experimental.pallas import tpu as pltpu


def _round_up(x, m):
    return (x + m - 1) // m * m


# ---------------------------------------------------------------------------
# Generic tiled matmul + bias (+ optional ReLU):  out = act(x @ w + b)
#
# Grid is (N-tiles, M-tiles): the inner axis sweeps M, so the weight block
# (indexed only by the outer axis) stays VMEM-resident across the whole M
# sweep and is DMA'd once per N tile.  Activations are cast to bf16 inside
# the kernel; weights are expected pre-cast to bf16 (prepare_params).
# ---------------------------------------------------------------------------
def _linear_kernel(x_ref, w_ref, b_ref, o_ref, *, activation):
    acc = jnp.dot(x_ref[...].astype(jnp.bfloat16),
                  w_ref[...].astype(jnp.bfloat16),
                  preferred_element_type=jnp.float32)
    acc = acc + b_ref[...]                      # f32 bias add
    if activation == "relu":
        acc = jnp.maximum(acc, 0.0)
    o_ref[...] = acc.astype(o_ref.dtype)


def linear_pallas(x, w, b, activation=None, *, tm=256, tn=256):
    """x: (M, K) f32, w: (K, N) bf16, b: (1, N) or (N,) f32 -> (M, N) f32.

    Tile guidance: v5e keep tm/tn <= 256 (16 MiB scoped-VMEM default);
    v6e sweep 512-1024; v7x cap around tm=256-512 with K un-gridded
    (64 MiB physical / 32 MiB scoped VMEM).
    # TODO(synk): add K-gridding with an f32 accumulator scratch for very
    # large K on v7x instead of keeping K un-gridded.
    """
    M, K = x.shape
    Kw, N = w.shape
    assert K == Kw
    b = b.reshape(1, N)

    # Full-dim blocks when they fit (no padding, no (8,128) constraint);
    # otherwise pad to sublane/lane-aligned tile multiples.
    if M <= tm:
        tm_eff, mp = M, M
    else:
        tm_eff = _round_up(tm, 8)
        mp = _round_up(M, tm_eff)
    if N <= tn:
        tn_eff, np_ = N, N
    else:
        tn_eff = _round_up(tn, 128)
        np_ = _round_up(N, tn_eff)

    xp = x if mp == M else jnp.pad(x, ((0, mp - M), (0, 0)))
    wp = w if np_ == N else jnp.pad(w, ((0, 0), (0, np_ - N)))
    bp = b if np_ == N else jnp.pad(b, ((0, 0), (0, np_ - N)))

    out = pl.pallas_call(
        functools.partial(_linear_kernel, activation=activation),
        out_shape=jax.ShapeDtypeStruct((mp, np_), jnp.float32),
        grid_spec=pl.GridSpec(
            grid=(np_ // tn_eff, mp // tm_eff),            # inner axis = M sweep
            in_specs=[
                pl.BlockSpec((tm_eff, K), lambda j, i: (i, 0)),   # activations
                pl.BlockSpec((K, tn_eff), lambda j, i: (0, j)),   # weight: resident
                pl.BlockSpec((1, tn_eff), lambda j, i: (0, j)),   # bias
            ],
            out_specs=pl.BlockSpec((tm_eff, tn_eff), lambda j, i: (i, j)),
        ),
        compiler_params=pltpu.CompilerParams(
            dimension_semantics=("parallel", "parallel")),
        cost_estimate=pl.CostEstimate(
            flops=2 * mp * K * np_,
            transcendentals=0,
            bytes_accessed=4 * mp * K + 2 * K * np_ + 4 * np_ + 4 * mp * np_),
    )(xp, wp, bp)
    if mp != M or np_ != N:
        out = out[:M, :N]
    return out


# ---------------------------------------------------------------------------
# Fused QKV projection + multi-head attention, one (batch) block per grid step.
# qkv = x @ Wqkv + b ; per-head softmax(q k^T * scale) v ; heads re-concatenated
# into the (S, E) layout that matches PyTorch's head-major reshape.
# ---------------------------------------------------------------------------
def _attn_block_kernel(x_ref, wqkv_ref, bqkv_ref, o_ref, *, num_heads, scale):
    x = x_ref[0].astype(jnp.bfloat16)                              # (S, E)
    qkv = jnp.dot(x, wqkv_ref[...].astype(jnp.bfloat16),
                  preferred_element_type=jnp.float32)
    qkv = (qkv + bqkv_ref[...]).astype(jnp.bfloat16)               # (S, 3E)
    S, three_e = qkv.shape
    E = three_e // 3
    dh = E // num_heads

    heads = []
    for h in range(num_heads):                                     # unrolled
        q = qkv[:, h * dh:(h + 1) * dh]
        k = qkv[:, E + h * dh:E + (h + 1) * dh]
        v = qkv[:, 2 * E + h * dh:2 * E + (h + 1) * dh]
        s = jnp.einsum("qd,kd->qk", q, k,
                       preferred_element_type=jnp.float32) * scale
        m = jnp.max(s, axis=-1, keepdims=True)
        p = jnp.exp(s - m)
        l = jnp.sum(p, axis=-1, keepdims=True)
        p = p * pl.reciprocal(l, approx=True)      # EUP divide, frees VALU slots
        heads.append(jnp.dot(p.astype(jnp.bfloat16), v,
                             preferred_element_type=jnp.float32))
    o_ref[0] = jnp.concatenate(heads, axis=-1).astype(o_ref.dtype)


def attention_pallas(h, wqkv, bqkv, *, num_heads, scale):
    """h: (B, S, E) f32; wqkv: (E, 3E) bf16; bqkv: (1, 3E) f32 -> (B, S, E) f32."""
    # TODO(synk): for long sequences, pad S to a sublane multiple with key
    # masking and tile KV with an online (flash) softmax instead of the full
    # in-VMEM softmax per batch.
    B, S, E = h.shape
    row = pl.BlockSpec((1, S, E), lambda b: (b, 0, 0))
    return pl.pallas_call(
        functools.partial(_attn_block_kernel, num_heads=num_heads, scale=scale),
        out_shape=jax.ShapeDtypeStruct((B, S, E), jnp.float32),
        grid_spec=pl.GridSpec(
            grid=(B,),
            in_specs=[row,
                      pl.BlockSpec((E, 3 * E), lambda b: (0, 0)),
                      pl.BlockSpec((1, 3 * E), lambda b: (0, 0))],
            out_specs=row,
        ),
        compiler_params=pltpu.CompilerParams(dimension_semantics=("parallel",)),
    )(h, wqkv, bqkv)


# ---------------------------------------------------------------------------
# Fused attention epilogue:  LayerNorm(attn @ Wo + bo + residual)
# ---------------------------------------------------------------------------
def _attn_out_ln_kernel(a_ref, r_ref, w_ref, b_ref, g_ref, bb_ref, o_ref, *, eps):
    a = a_ref[0].astype(jnp.bfloat16)                              # (S, E)
    proj = jnp.dot(a, w_ref[...].astype(jnp.bfloat16),
                   preferred_element_type=jnp.float32) + b_ref[...]
    h = proj + r_ref[0]
    mu = jnp.mean(h, axis=-1, keepdims=True)
    hc = h - mu
    var = jnp.mean(hc * hc, axis=-1, keepdims=True)
    y = hc * jax.lax.rsqrt(var + eps) * g_ref[...] + bb_ref[...]
    o_ref[0] = y.astype(o_ref.dtype)


def attn_out_ln_pallas(attn, res, wo, bo, gamma, beta, eps=1e-5):
    B, S, E = attn.shape
    row = pl.BlockSpec((1, S, E), lambda b: (b, 0, 0))
    vec = pl.BlockSpec((1, E), lambda b: (0, 0))
    return pl.pallas_call(
        functools.partial(_attn_out_ln_kernel, eps=eps),
        out_shape=jax.ShapeDtypeStruct((B, S, E), jnp.float32),
        grid_spec=pl.GridSpec(
            grid=(B,),
            in_specs=[row, row,
                      pl.BlockSpec((E, E), lambda b: (0, 0)),
                      vec, vec, vec],
            out_specs=row,
        ),
        compiler_params=pltpu.CompilerParams(dimension_semantics=("parallel",)),
    )(attn, res, wo, bo, gamma, beta)


# ---------------------------------------------------------------------------
# Fused MLP + residual + LayerNorm:  LN(relu(x @ W1 + b1) @ W2 + b2 + x)
# ---------------------------------------------------------------------------
def _mlp_ln_kernel(x_ref, w1_ref, b1_ref, w2_ref, b2_ref, g_ref, bb_ref, o_ref,
                   *, eps):
    x = x_ref[0]                                                   # (S, E) f32
    h1 = jnp.dot(x.astype(jnp.bfloat16), w1_ref[...].astype(jnp.bfloat16),
                 preferred_element_type=jnp.float32) + b1_ref[...]
    h1 = jnp.maximum(h1, 0.0)
    h2 = jnp.dot(h1.astype(jnp.bfloat16), w2_ref[...].astype(jnp.bfloat16),
                 preferred_element_type=jnp.float32) + b2_ref[...]
    h = h2 + x
    mu = jnp.mean(h, axis=-1, keepdims=True)
    hc = h - mu
    var = jnp.mean(hc * hc, axis=-1, keepdims=True)
    y = hc * jax.lax.rsqrt(var + eps) * g_ref[...] + bb_ref[...]
    o_ref[0] = y.astype(o_ref.dtype)


def mlp_ln_pallas(x, w1, b1, w2, b2, gamma, beta, eps=1e-5):
    B, S, E = x.shape
    Hd = w1.shape[1]
    row = pl.BlockSpec((1, S, E), lambda b: (b, 0, 0))
    vec_e = pl.BlockSpec((1, E), lambda b: (0, 0))
    return pl.pallas_call(
        functools.partial(_mlp_ln_kernel, eps=eps),
        out_shape=jax.ShapeDtypeStruct((B, S, E), jnp.float32),
        grid_spec=pl.GridSpec(
            grid=(B,),
            in_specs=[row,
                      pl.BlockSpec((E, Hd), lambda b: (0, 0)),
                      pl.BlockSpec((1, Hd), lambda b: (0, 0)),
                      pl.BlockSpec((Hd, E), lambda b: (0, 0)),
                      vec_e, vec_e, vec_e],
            out_specs=row,
        ),
        compiler_params=pltpu.CompilerParams(dimension_semantics=("parallel",)),
    )(x, w1, b1, w2, b2, gamma, beta)


# ---------------------------------------------------------------------------
# One-time parameter preparation: concat QKV, reshape the conv weight to a
# matmul weight, cast all matrices to bf16 and biases/LN params to (1, N) f32.
# The per-forward path never re-pads / re-casts parameters.
# ---------------------------------------------------------------------------
def prepare_params(raw):
    E = raw["patch_w"].shape[0]
    prep = {
        "patch_w": raw["patch_w"].reshape(E, -1).T.astype(jnp.bfloat16),
        "patch_b": raw["patch_b"].reshape(1, -1).astype(jnp.float32),
        "cls_token": raw["cls_token"].astype(jnp.float32),
        "pos_emb": raw["pos_emb"].astype(jnp.float32),
        "fc_w": raw["fc_w"].astype(jnp.bfloat16),
        "fc_b": raw["fc_b"].reshape(1, -1).astype(jnp.float32),
        "layers": [],
    }
    for lp in raw["layers"]:
        prep["layers"].append({
            "wqkv": jnp.concatenate([lp["wq"], lp["wk"], lp["wv"]],
                                    axis=1).astype(jnp.bfloat16),
            "bqkv": jnp.concatenate([lp["bq"], lp["bk"], lp["bv"]]
                                    ).reshape(1, -1).astype(jnp.float32),
            "wo": lp["wo"].astype(jnp.bfloat16),
            "bo": lp["bo"].reshape(1, -1).astype(jnp.float32),
            "ln1_g": lp["ln1_g"].reshape(1, -1).astype(jnp.float32),
            "ln1_b": lp["ln1_b"].reshape(1, -1).astype(jnp.float32),
            "w1": lp["w1"].astype(jnp.bfloat16),
            "b1": lp["b1"].reshape(1, -1).astype(jnp.float32),
            "w2": lp["w2"].astype(jnp.bfloat16),
            "b2": lp["b2"].reshape(1, -1).astype(jnp.float32),
            "ln2_g": lp["ln2_g"].reshape(1, -1).astype(jnp.float32),
            "ln2_b": lp["ln2_b"].reshape(1, -1).astype(jnp.float32),
        })
    return prep


# ---------------------------------------------------------------------------
# Layout glue + model forward (Pallas path).
# ---------------------------------------------------------------------------
def _extract_patches(x, patch_size):
    """NCHW image -> (B*n_patches, C*p*p); flattening order (c, kh, kw) matches
    conv_weight.reshape(E, C*p*p).
    # TODO(synk): at production sizes avoid this extra HBM pass (NHWC producer
    # layout or allow_input_fusion on the patch-embed pallas_call).
    """
    B, C, H, W = x.shape
    p = patch_size
    hp, wp = H // p, W // p
    patches = x.reshape(B, C, hp, p, wp, p).transpose(0, 2, 4, 1, 3, 5)
    return patches.reshape(B * hp * wp, C * p * p), hp * wp


def vit_forward_pallas(x, prep, *, patch_size, num_heads):
    B = x.shape[0]
    E = prep["patch_w"].shape[1]
    head_dim = E // num_heads
    scale = 1.0 / (head_dim ** 0.5)

    # Patch embedding: Conv2d(k=p, s=p) == patch-matrix @ reshaped weight.
    patches, n_patches = _extract_patches(x, patch_size)
    h = linear_pallas(patches, prep["patch_w"], prep["patch_b"])
    h = h.reshape(B, n_patches, E)

    # cls token + position embeddings (layout/elementwise glue).
    cls = jnp.broadcast_to(prep["cls_token"], (B, 1, E))
    h = jnp.concatenate([cls, h], axis=1) + prep["pos_emb"]        # (B, S, E)

    for lp in prep["layers"]:
        attn = attention_pallas(h, lp["wqkv"], lp["bqkv"],
                                num_heads=num_heads, scale=scale)
        h1 = attn_out_ln_pallas(attn, h, lp["wo"], lp["bo"],
                                lp["ln1_g"], lp["ln1_b"])          # norm1(proj+x)
        h = mlp_ln_pallas(h1, lp["w1"], lp["b1"], lp["w2"], lp["b2"],
                          lp["ln2_g"], lp["ln2_b"])                # norm2(ff+x)

    cls_final = h[:, 0]                                            # (B, E)
    return linear_pallas(cls_final, prep["fc_w"], prep["fc_b"])    # (B, classes)


# ---------------------------------------------------------------------------
# Pure-JAX reference mirroring the kernel numerics (bf16 matmul operands,
# f32 accumulation, bf16 qkv / softmax-probability casts) for correctness.
# ---------------------------------------------------------------------------
def vit_forward_ref(x, prep, *, patch_size, num_heads, eps=1e-5):
    B = x.shape[0]
    E = prep["patch_w"].shape[1]
    head_dim = E // num_heads
    scale = 1.0 / (head_dim ** 0.5)

    def lin(a, w, b, act=None):
        y = jnp.dot(a.astype(jnp.bfloat16), w.astype(jnp.bfloat16),
                    preferred_element_type=jnp.float32) + b
        return jnp.maximum(y, 0.0) if act == "relu" else y

    def ln(h, g, bb):
        mu = jnp.mean(h, axis=-1, keepdims=True)
        hc = h - mu
        var = jnp.mean(hc * hc, axis=-1, keepdims=True)
        return hc * jax.lax.rsqrt(var + eps) * g + bb

    patches, n_patches = _extract_patches(x, patch_size)
    h = lin(patches, prep["patch_w"], prep["patch_b"]).reshape(B, n_patches, E)
    cls = jnp.broadcast_to(prep["cls_token"], (B, 1, E))
    h = jnp.concatenate([cls, h], axis=1) + prep["pos_emb"]
    S = n_patches + 1

    for lp in prep["layers"]:
        x2 = h.reshape(B * S, E)
        qkv = lin(x2, lp["wqkv"], lp["bqkv"]).astype(jnp.bfloat16)
        q = qkv[:, :E].reshape(B, S, num_heads, head_dim)
        k = qkv[:, E:2 * E].reshape(B, S, num_heads, head_dim)
        v = qkv[:, 2 * E:].reshape(B, S, num_heads, head_dim)
        s = jnp.einsum("bqhd,bkhd->bhqk", q, k,
                       preferred_element_type=jnp.float32) * scale
        p = jax.nn.softmax(s, axis=-1)
        o = jnp.einsum("bhqk,bkhd->bqhd", p.astype(jnp.bfloat16), v,
                       preferred_element_type=jnp.float32).reshape(B * S, E)
        h1 = ln(lin(o, lp["wo"], lp["bo"]) + x2, lp["ln1_g"], lp["ln1_b"])
        ff = lin(lin(h1, lp["w1"], lp["b1"], "relu"), lp["w2"], lp["b2"])
        h = ln(ff + h1, lp["ln2_g"], lp["ln2_b"]).reshape(B, S, E)

    return lin(h[:, 0], prep["fc_w"], prep["fc_b"])


if __name__ == "__main__":
    # Small, module-consistent hyperparameters.
    batch_size = 2
    in_channels = 4
    img_size = 16
    patch_size = 4
    emb_dim = 32
    num_heads = 4
    forward_expansion = 4
    num_classes = 10
    num_layers = 2

    key = jax.random.PRNGKey(0)
    keys = iter(jax.random.split(key, 64))

    def nrm(k, shape, s=0.02):
        return jax.random.normal(k, shape, dtype=jnp.float32) * s

    n_patches = (img_size // patch_size) ** 2
    hidden = forward_expansion * emb_dim

    raw = {
        "patch_w": nrm(next(keys), (emb_dim, in_channels, patch_size, patch_size)),
        "patch_b": nrm(next(keys), (emb_dim,)),
        "cls_token": nrm(next(keys), (1, 1, emb_dim), 1.0),
        "pos_emb": nrm(next(keys), (1, 1 + n_patches, emb_dim), 1.0),
        "fc_w": nrm(next(keys), (emb_dim, num_classes)),
        "fc_b": nrm(next(keys), (num_classes,)),
        "layers": [],
    }
    for _ in range(num_layers):
        raw["layers"].append({
            "wq": nrm(next(keys), (emb_dim, emb_dim)), "bq": nrm(next(keys), (emb_dim,)),
            "wk": nrm(next(keys), (emb_dim, emb_dim)), "bk": nrm(next(keys), (emb_dim,)),
            "wv": nrm(next(keys), (emb_dim, emb_dim)), "bv": nrm(next(keys), (emb_dim,)),
            "wo": nrm(next(keys), (emb_dim, emb_dim)), "bo": nrm(next(keys), (emb_dim,)),
            "ln1_g": jnp.ones((emb_dim,), jnp.float32),
            "ln1_b": jnp.zeros((emb_dim,), jnp.float32),
            "w1": nrm(next(keys), (emb_dim, hidden)), "b1": nrm(next(keys), (hidden,)),
            "w2": nrm(next(keys), (hidden, emb_dim)), "b2": nrm(next(keys), (emb_dim,)),
            "ln2_g": jnp.ones((emb_dim,), jnp.float32),
            "ln2_b": jnp.zeros((emb_dim,), jnp.float32),
        })

    x = jax.random.normal(next(keys),
                          (batch_size, in_channels, img_size, img_size),
                          dtype=jnp.float32)

    prep = prepare_params(raw)   # one-time: concat/reshape/cast all weights

    out = vit_forward_pallas(x, prep, patch_size=patch_size, num_heads=num_heads)
    out = jax.block_until_ready(out)

    ref = vit_forward_ref(x, prep, patch_size=patch_size, num_heads=num_heads)
    ref = jax.block_until_ready(ref)

    assert out.shape == (batch_size, num_classes)
    assert jnp.allclose(out, ref, atol=1e-2, rtol=1e-2), (
        float(jnp.max(jnp.abs(out - ref))))

    print("KERNEL_OK")
</pallas_src>

<mosaic_0001>
module attributes {stable_mosaic.version = 11 : i64} {
  func.func @_linear_kernel(%arg0: i32, %arg1: i32, %arg2: memref<32x64xf32, #tpu.memory_space<vmem>>, %arg3: memref<64x32xbf16, #tpu.memory_space<vmem>>, %arg4: memref<1x32xf32, #tpu.memory_space<vmem>>, %arg5: memref<32x32xf32, #tpu.memory_space<vmem>>) attributes {dimension_semantics = [#tpu.dimension_semantics<parallel>, #tpu.dimension_semantics<parallel>], iteration_bounds = array<i64: 1, 1>, scalar_prefetch = 0 : i64, scratch_operands = 0 : i64, tpu.core_type = #tpu.core_type<tc>, window_params = [{transform_indices = @transform_0, window_bounds = array<i64: 32, 64>}, {transform_indices = @transform_1, window_bounds = array<i64: 64, 32>}, {transform_indices = @transform_2, window_bounds = array<i64: 1, 32>}, {transform_indices = @transform_3, window_bounds = array<i64: 32, 32>}]} {
    %c0 = arith.constant 0 : index
    %c0_0 = arith.constant 0 : index
    %0 = vector.load %arg2[%c0, %c0_0] : memref<32x64xf32, #tpu.memory_space<vmem>>, vector<32x64xf32>
    %1 = arith.truncf %0 : vector<32x64xf32> to vector<32x64xbf16>
    %c0_1 = arith.constant 0 : index
    %c0_2 = arith.constant 0 : index
    %2 = vector.load %arg3[%c0_1, %c0_2] : memref<64x32xbf16, #tpu.memory_space<vmem>>, vector<64x32xbf16>
    %cst = arith.constant dense<0.000000e+00> : vector<32x32xf32>
    %3 = tpu.matmul %1, %2, %cst {dimension_numbers = #tpu.dot_dimension_numbers<[1], [0], [0], [1], [0, 0, 1, 1], [], []>} : vector<32x64xbf16>, vector<64x32xbf16>, vector<32x32xf32> -> vector<32x32xf32>
    %c0_3 = arith.constant 0 : index
    %c0_4 = arith.constant 0 : index
    %4 = vector.load %arg4[%c0_3, %c0_4] : memref<1x32xf32, #tpu.memory_space<vmem>>, vector<1x32xf32>
    %5 = vector.broadcast %4 : vector<1x32xf32> to vector<32x32xf32>
    %6 = arith.addf %3, %5 : vector<32x32xf32>
    %c0_5 = arith.constant 0 : index
    %c0_6 = arith.constant 0 : index
    %7 = vector.load %arg5[%c0_5, %c0_6] : memref<32x32xf32, #tpu.memory_space<vmem>>, vector<32x32xf32>
    tpu.vector_store %arg5[%c0_5, %c0_6], %6 {strides = array<i32>} : memref<32x32xf32, #tpu.memory_space<vmem>>, vector<32x32xf32>,
    return
  }
  func.func @transform_0(%arg0: i32, %arg1: i32) -> (i32, i32) {
    %c0_i32 = arith.constant 0 : i32
    %c0_i32_0 = arith.constant 0 : i32
    return %arg1, %c0_i32 : i32, i32
  }
  func.func @transform_1(%arg0: i32, %arg1: i32) -> (i32, i32) {
    %c0_i32 = arith.constant 0 : i32
    %c0_i32_0 = arith.constant 0 : i32
    return %c0_i32, %arg0 : i32, i32
  }
  func.func @transform_2(%arg0: i32, %arg1: i32) -> (i32, i32) {
    %c0_i32 = arith.constant 0 : i32
    %c0_i32_0 = arith.constant 0 : i32
    return %c0_i32, %arg0 : i32, i32
  }
  func.func @transform_3(%arg0: i32, %arg1: i32) -> (i32, i32) {
    %c0_i32 = arith.constant 0 : i32
    return %arg1, %arg0 : i32, i32
  }
}

</mosaic_0001>

<llo_original>
// kernel: tpu_custom_call.1
$region0: #{tpu_custom_call.1}
  #allocation0 [shape = 'u32[]', space=smem, size = 0x4, offset = 0x4, fixed_abs, tag = 'smem constant byte address 0x4 - core index']
  #allocation1 [shape = 'u32[72,128]{1,0:T(1,128)}', space=vmem, size = 0x9000, scoped, tag = 'internal scratch']
  %s0 = inlined_call_operand.vmem [shape: f32[32,64], index: 0, kind: input, shape index: {}]
  %s1 = inlined_call_operand.vmem [shape: bf16[64,32], index: 1, kind: input, shape index: {}]
  %s2 = inlined_call_operand.vmem [shape: f32[1,32], index: 2, kind: input, shape index: {}]
  %s3 = inlined_call_operand.hbm [shape: f32[32,32], index: 3, kind: output, shape index: {}]
  %s4 = sld [smem:[#allocation0]]
  $region22: #{tpu_custom_call.1} parent=0
    _
  %s6 = ssub.s32 1, %s4
  %s7 = scalar_select 0, %s6, %s4
  $region1: #{tpu_custom_call.1} parent=0
    #allocation2 [shape = 'u8[16384]{0}', space=vmem, size = 0x4000, scoped, tag = 'output window, operand 0, single buffered']
    #allocation3 [shape = 's32[1]{0}', space=sflag, size = 0x4, scoped, tag = 'scoped memory for tpu_custom_call.1']
    %8 = vsyncpa [#allocation3], 0
    // Predicated region
    $region2: #{tpu_custom_call.1} parent=1 // pred_check
      _
    $region3: #{tpu_custom_call.1} parent=1 // pred_check_branch
      %10 = sbr.rel (0) target = $region5
    $region4: #{tpu_custom_call.1} parent=1 // pred_region
      _
    $region5: #{tpu_custom_call.1} parent=1 // pred_fallthru
      _
    // Predicated region
    $region6: #{tpu_custom_call.1} parent=1 // pred_check
      _
    $region7: #{tpu_custom_call.1} parent=1 // pred_check_branch
      %12 = sbr.rel (0) target = $region9
    $region8: #{tpu_custom_call.1} parent=1 // pred_region
      _
    $region9: #{tpu_custom_call.1} parent=1 // pred_fallthru
      _
    // Predicated region
    $region10: #{tpu_custom_call.1} parent=1 // pred_check
      _
    $region11: #{tpu_custom_call.1} parent=1 // pred_check_branch
      %14 = sbr.rel (0) target = $region13
    $region12: #{tpu_custom_call.1} parent=1 // pred_region
      _
    $region13: #{tpu_custom_call.1} parent=1 // pred_fallthru
      _
    %v16 = vld [vmem:[%s0] sm:$0xff]
    %v17 = vld [vmem:[%s0 + $0x8] sm:$0xff]
    %v18 = vld [vmem:[%s0 + $0x10] sm:$0xff]
    %v19 = vld [vmem:[%s0 + $0x18] sm:$0xff]
    %v20 = vpack.c.bf16 %v17, %v16
    %v21 = vpack.c.bf16 %v19, %v18
    %v22 = vld [vmem:[%s1] sm:$0xf]
    %v23 = vld [vmem:[%s1 + $0x4] sm:$0xf]
    %v24 = vld [vmem:[%s1 + $0x8] sm:$0xf]
    %v25 = vld [vmem:[%s1 + $0xc] sm:$0xf]
    %v26 = vld [vmem:[%s1 + $0x10] sm:$0xf]
    %v27 = vld [vmem:[%s1 + $0x14] sm:$0xf]
    %v28 = vld [vmem:[%s1 + $0x18] sm:$0xf]
    %v29 = vld [vmem:[%s1 + $0x1c] sm:$0xf]
    %v30 = vld [vmem:[%s2] sm:$0x1]
    %v32 = vperm.slane %v30, 0
    %v42 = vunpack.c.l.b16 %v22
    %v43 = vunpack.c.l.b16 %v23
    %v44 = vunpack.c.l.b16 %v24
    %v45 = vunpack.c.l.b16 %v25
    %v46 = vunpack.c.l.b16 %v26
    %v47 = vunpack.c.l.b16 %v27
    %v48 = vunpack.c.l.b16 %v28
    %v49 = vunpack.c.l.b16 %v29
    %v50 = vpack.c.b16 %v43, %v42
    %v51 = vpack.c.b16 %v45, %v44
    %v52 = vpack.c.b16 %v47, %v46
    %v53 = vpack.c.b16 %v49, %v48
    %vm58 = vcmask 523264
    %v60 = vsel %vm58, %v20, 0
    %v63 = vsel %vm58, %v21, 0
    %65 = vmatpush.bf16.msra.mxu0 0
    %66 = vmatpush.bf16.msra.mxu0 0
    %67 = vmatpush.bf16.msra.mxu0 0
    %68 = vmatpush.bf16.msra.mxu0 0
    %69 = vmatpush.bf16.msra.mxu0 %v53
    %70 = vmatpush.bf16.msra.mxu0 %v52
    %71 = vmatpush.bf16.msra.mxu0 %v51
    %72 = vmatpush.bf16.msra.mxu0 %v50
    %73 = vmatmul.bf16.gmra.mxu0 %v60
    %v74 = vpop.f32.mrf.mxu0
    %v75 = vadd.f32 %v32, %v74
    %v76 = vpop.f32.mrf.mxu0
    %v77 = vadd.f32 %v32, %v76
    %78 = vmatmul.bf16.gmra.mxu0 %v63
    %v79 = vpop.f32.mrf.mxu0
    %v80 = vadd.f32 %v32, %v79
    %v81 = vpop.f32.mrf.mxu0
    %v82 = vadd.f32 %v32, %v81
    %83 = vdwg.mxu0
    %vm84 = vcmask 261120
    %85 = vst.msk [vmem:[#allocation2] sm:$0xff] %vm84, %v75
    %86 = vst.msk [vmem:[#allocation2 + $0x8] sm:$0xff] %vm84, %v77
    %87 = vst.msk [vmem:[#allocation2 + $0x10] sm:$0xff] %vm84, %v80
    %88 = vst.msk [vmem:[#allocation2 + $0x18] sm:$0xff] %vm84, %v82
    // Predicated region
    $region14: #{tpu_custom_call.1} parent=1 // pred_check
      _
    $region15: #{tpu_custom_call.1} parent=1 // pred_check_branch
      %90 = sbr.rel (0) target = $region17
    $region16: #{tpu_custom_call.1} parent=1 // pred_region
      %92 = vsyncadd [#allocation3], 0
      %s93 = sshll.u32 [#allocation2], 4
      %s94 = int_to_ptr.vmem [resolvable:$true] %s93
      %s95 = sshll.u32 %s3, 4
      %s96 = int_to_ptr.hbm [resolvable:$true] %s95
      %101 = dma.vmem_to_hbm [thread:$0]  %s94, 512, %s96, [#allocation3], 128, 128, 8
    $region17: #{tpu_custom_call.1} parent=1 // pred_fallthru
      _
    // Predicated region
    $region18: #{tpu_custom_call.1} parent=1 // pred_check
      _
    $region19: #{tpu_custom_call.1} parent=1 // pred_check_branch
      %103 = sbr.rel (0) target = $region21
    $region20: #{tpu_custom_call.1} parent=1 // pred_region
      %105 = dma.done [#allocation3], 512
    $region21: #{tpu_custom_call.1} parent=1 // pred_fallthru
      _
    %106 = vsyncpa [#allocation3], 1

</llo_original>
